<compile_context>
chip_gen: v7x
topology: tpu7x:2x2x1
jax: 0.10.0
libtpu: 0.0.40
codegen_flags: <defaults>
</compile_context>

<pallas_src>
import functools

import jax
import jax.numpy as jnp
import numpy as np
from jax.experimental import pallas as pl
from jax.experimental.pallas import tpu as pltpu


def _convnet_kernel(xt_ref, w1_ref, b1_ref, w2_ref, b2_ref, o_ref, patch_ref,
                    *, cin, m_tile, halo, tap_offsets):
    # xt_ref   : (1, Cin, m_tile + 2*halo) haloed lane tile of padded x, lanes = flat (n,i,j)
    # w1_ref   : (32, 9*Cin)               conv1 weights, columns ordered (ky, kx, c)
    # b1_ref   : (32, 1)                   conv1 bias
    # w2_ref   : (32, 1)                   conv2 (1x1) weights
    # b2_ref   : (1, 1)                    conv2 bias
    # o_ref    : (1, m_tile)               lane-dense output row (padded output grid)
    # patch_ref: (9*Cin, m_tile)           on-chip im2col staging (VMEM scratch)

    # Build the im2col block on-chip: each 3x3 tap is a static lane shift of
    # the haloed tile (the 9x-expanded tensor never touches HBM).
    for t, off in enumerate(tap_offsets):
        s = halo + off
        patch_ref[t * cin:(t + 1) * cin, :] = xt_ref[0, :, s:s + m_tile]

    # conv1: one MXU matmul, K = 9*Cin, f32 accumulation.
    h = jnp.dot(w1_ref[...], patch_ref[...], preferred_element_type=jnp.float32)
    h = jnp.maximum(h + b1_ref[...], 0.0)

    # conv2 (single output channel): VPU multiply + cross-sublane reduce
    # instead of a (1,32)x(32,m_tile) MXU op.
    out = jnp.sum(h * w2_ref[...], axis=0, keepdims=True) + b2_ref[...]
    # Note: (1, m_tile) stores use 1 of 8 sublanes; output is ~1/36 of traffic
    # so the denser (8, m_tile/8) relayout is not worth the XLU shuffles here.
    o_ref[...] = out.astype(o_ref.dtype)


def _default_tile_target():
    """Generation-aware lane-tile target (bigger on v7x's 3.2 TB/s HBM)."""
    try:
        kind = jax.devices()[0].device_kind.lower()
    except Exception:
        return 16384
    return 32768 if "v7" in kind else 16384


def _choose_m_tile(mp, cin, target):
    """Lane tile over the flattened padded (n,i,j) axis.

    Large tiles amortize the ~0.35us per-grid-step overhead; cap so the
    on-chip (9*Cin, m_tile) f32 staging block stays ~<= 4 MiB (well under the
    default scoped VMEM limit on v5e/v6e/v7x).  Keep >=2 grid steps when the
    problem allows so both v7x TensorCores get work.
    """
    cap = max(512, ((4 << 20) // (9 * cin * 4)) // 128 * 128)
    target = min(target, cap)
    if mp >= 2 * target:
        return target
    half = -(-mp // 2)
    return max(128, min(target, -(-half // 128) * 128))


def convnet_forward(x_nchw, w1, b1, w2, b2):
    """Forward pass. x_nchw: (N, Cin, H, W) float32 -> (N, 1, H, W) float32."""
    N, C, H, W = x_nchw.shape
    Hp, Wp = H + 2, W + 2
    Mp = N * Hp * Wp                       # padded output grid, flattened (n, i, j)

    # Channel-major + spatial pad, then flatten (n, i, j) onto one lane axis.
    # (A single cheap pass over x; the old 9x im2col expansion is gone.)
    xc = jnp.transpose(x_nchw, (1, 0, 2, 3))                  # (Cin, N, H, W)
    xp = jnp.pad(xc, ((0, 0), (0, 0), (1, 1), (1, 1)))        # (Cin, N, Hp, Wp)
    xf = xp.reshape(C, Mp)                                    # free (row-major) reshape

    # 3x3 tap offsets on the flat lane axis (valid for interior positions;
    # border lanes give garbage that is sliced off after the kernel).
    tap_offsets = tuple((ky - 1) * Wp + (kx - 1)
                        for ky in range(3) for kx in range(3))
    halo = max(128, -(-(Wp + 1) // 128) * 128)                # >= Wp+1, lane aligned

    m_tile = _choose_m_tile(Mp, C, _default_tile_target())
    num_tiles = -(-Mp // m_tile)
    mp_r = num_tiles * m_tile

    # Zero-extend the lane axis and cut into overlapping haloed tiles: this is
    # the only wrapper-side layout copy left (~(1 + 2*halo/m_tile)x of x).
    xe = jnp.pad(xf, ((0, 0), (halo, halo + (mp_r - Mp))))
    xt = jnp.stack([xe[:, t * m_tile: t * m_tile + m_tile + 2 * halo]
                    for t in range(num_tiles)], axis=0)       # (T, Cin, m_tile+2*halo)

    # conv1 weights HWIO (3,3,Cin,32) -> (32, 9*Cin), column order (ky, kx, c).
    w1p = jnp.transpose(w1, (3, 0, 1, 2)).reshape(32, 9 * C)

    kernel = functools.partial(_convnet_kernel, cin=C, m_tile=m_tile,
                               halo=halo, tap_offsets=tap_offsets)

    out = pl.pallas_call(
        kernel,
        out_shape=jax.ShapeDtypeStruct((1, mp_r), jnp.float32),
        grid=(num_tiles,),
        in_specs=[
            pl.BlockSpec((1, C, m_tile + 2 * halo), lambda i: (i, 0, 0)),
            pl.BlockSpec((32, 9 * C), lambda i: (0, 0)),   # resident weights
            pl.BlockSpec((32, 1), lambda i: (0, 0)),
            pl.BlockSpec((32, 1), lambda i: (0, 0)),
            pl.BlockSpec((1, 1), lambda i: (0, 0)),
        ],
        out_specs=pl.BlockSpec((1, m_tile), lambda i: (0, i)),
        scratch_shapes=[pltpu.VMEM((9 * C, m_tile), jnp.float32)],
        compiler_params=pltpu.CompilerParams(
            dimension_semantics=("parallel",)),
    )(xt, w1p, b1.reshape(32, 1), w2.reshape(32, 1), b2.reshape(1, 1))

    # Flat padded-grid output -> (N, Hp, Wp); interior = the real conv output.
    out_p = out[0, :Mp].reshape(N, Hp, Wp)
    return out_p[:, 1:H + 1, 1:W + 1].reshape(N, 1, H, W)


def _reference_forward(x_nchw, w1, b1, w2, b2):
    """Pure-JAX reference (lax.conv) for correctness checking."""
    y = jax.lax.conv_general_dilated(
        x_nchw, w1, window_strides=(1, 1), padding="SAME",
        dimension_numbers=("NCHW", "HWIO", "NCHW"))
    y = y + b1.reshape(1, -1, 1, 1)
    y = jnp.maximum(y, 0.0)
    z = jax.lax.conv_general_dilated(
        y, w2.reshape(1, 1, 32, 1), window_strides=(1, 1), padding="SAME",
        dimension_numbers=("NCHW", "HWIO", "NCHW"))
    return z + b2.reshape(1, -1, 1, 1)


def init_params(key, in_channel):
    """Deterministic init matching the PyTorch module's parameter shapes
    (conv1: (32, Cin, 3, 3) stored HWIO (3,3,Cin,32); conv2: (1, 32, 1, 1) -> (32, 1))."""
    k1, k2, k3, k4 = jax.random.split(key, 4)
    fan1 = in_channel * 3 * 3
    bound1 = 1.0 / np.sqrt(fan1)
    w1 = jax.random.uniform(k1, (3, 3, in_channel, 32), jnp.float32, -bound1, bound1)
    b1 = jax.random.uniform(k2, (32,), jnp.float32, -bound1, bound1)
    fan2 = 32 * 1 * 1
    bound2 = 1.0 / np.sqrt(fan2)
    w2 = jax.random.uniform(k3, (32, 1), jnp.float32, -bound2, bound2)
    b2 = jax.random.uniform(k4, (1,), jnp.float32, -bound2, bound2)
    return w1, b1, w2, b2


if __name__ == "__main__":
    key = jax.random.PRNGKey(0)
    kx, kp = jax.random.split(key)

    N, C_IN, H, W = 2, 4, 16, 16
    x = jax.random.normal(kx, (N, C_IN, H, W), jnp.float32)
    w1, b1, w2, b2 = init_params(kp, C_IN)

    out = convnet_forward(x, w1, b1, w2, b2)
    out = jax.block_until_ready(out)

    assert out.shape == (N, 1, H, W), out.shape

    ref = jax.block_until_ready(_reference_forward(x, w1, b1, w2, b2))
    np.testing.assert_allclose(np.asarray(out), np.asarray(ref), rtol=1e-4, atol=1e-4)

    print("KERNEL_OK")
</pallas_src>

<mosaic_0001>
module attributes {stable_mosaic.version = 11 : i64} {
  func.func @_convnet_kernel(%arg0: i32, %arg1: memref<1x4x640xf32, #tpu.memory_space<vmem>>, %arg2: memref<32x36xf32, #tpu.memory_space<vmem>>, %arg3: memref<32x1xf32, #tpu.memory_space<vmem>>, %arg4: memref<32x1xf32, #tpu.memory_space<vmem>>, %arg5: memref<1x1xf32, #tpu.memory_space<vmem>>, %arg6: memref<1x384xf32, #tpu.memory_space<vmem>>, %arg7: memref<36x384xf32, #tpu.memory_space<vmem>>) attributes {dimension_semantics = [#tpu.dimension_semantics<parallel>], iteration_bounds = array<i64: 2>, scalar_prefetch = 0 : i64, scratch_operands = 1 : i64, tpu.core_type = #tpu.core_type<tc>, window_params = [{transform_indices = @transform_0, window_bounds = array<i64: 1, 4, 640>}, {pipeline_mode = #tpu.pipeline_mode<synchronous>, transform_indices = @transform_1, window_bounds = array<i64: 32, 36>}, {pipeline_mode = #tpu.pipeline_mode<synchronous>, transform_indices = @transform_2, window_bounds = array<i64: 32, 1>}, {pipeline_mode = #tpu.pipeline_mode<synchronous>, transform_indices = @transform_3, window_bounds = array<i64: 32, 1>}, {pipeline_mode = #tpu.pipeline_mode<synchronous>, transform_indices = @transform_4, window_bounds = array<i64: 1, 1>}, {transform_indices = @transform_5, window_bounds = array<i64: 1, 384>}]} {
    %c0 = arith.constant 0 : index
    %c0_0 = arith.constant 0 : index
    %c109 = arith.constant 109 : index
    %0 = vector.load %arg1[%c0, %c0_0, %c109] : memref<1x4x640xf32, #tpu.memory_space<vmem>>, vector<1x4x384xf32>
    %1 = vector.shape_cast %0 : vector<1x4x384xf32> to vector<4x384xf32>
    %c0_1 = arith.constant 0 : index
    %c0_2 = arith.constant 0 : index
    %2 = vector.load %arg7[%c0_1, %c0_2] : memref<36x384xf32, #tpu.memory_space<vmem>>, vector<4x384xf32>
    tpu.vector_store %arg7[%c0_1, %c0_2], %1 {strides = array<i32>} : memref<36x384xf32, #tpu.memory_space<vmem>>, vector<4x384xf32>,
    %c0_3 = arith.constant 0 : index
    %c0_4 = arith.constant 0 : index
    %c110 = arith.constant 110 : index
    %3 = vector.load %arg1[%c0_3, %c0_4, %c110] : memref<1x4x640xf32, #tpu.memory_space<vmem>>, vector<1x4x384xf32>
    %4 = vector.shape_cast %3 : vector<1x4x384xf32> to vector<4x384xf32>
    %c4 = arith.constant 4 : index
    %c0_5 = arith.constant 0 : index
    %5 = vector.load %arg7[%c4, %c0_5] : memref<36x384xf32, #tpu.memory_space<vmem>>, vector<4x384xf32>
    tpu.vector_store %arg7[%c4, %c0_5], %4 {strides = array<i32>} : memref<36x384xf32, #tpu.memory_space<vmem>>, vector<4x384xf32>,
    %c0_6 = arith.constant 0 : index
    %c0_7 = arith.constant 0 : index
    %c111 = arith.constant 111 : index
    %6 = vector.load %arg1[%c0_6, %c0_7, %c111] : memref<1x4x640xf32, #tpu.memory_space<vmem>>, vector<1x4x384xf32>
    %7 = vector.shape_cast %6 : vector<1x4x384xf32> to vector<4x384xf32>
    %c8 = arith.constant 8 : index
    %c0_8 = arith.constant 0 : index
    %8 = vector.load %arg7[%c8, %c0_8] : memref<36x384xf32, #tpu.memory_space<vmem>>, vector<4x384xf32>
    tpu.vector_store %arg7[%c8, %c0_8], %7 {strides = array<i32>} : memref<36x384xf32, #tpu.memory_space<vmem>>, vector<4x384xf32>,
    %c0_9 = arith.constant 0 : index
    %c0_10 = arith.constant 0 : index
    %c127 = arith.constant 127 : index
    %9 = vector.load %arg1[%c0_9, %c0_10, %c127] : memref<1x4x640xf32, #tpu.memory_space<vmem>>, vector<1x4x384xf32>
    %10 = vector.shape_cast %9 : vector<1x4x384xf32> to vector<4x384xf32>
    %c12 = arith.constant 12 : index
    %c0_11 = arith.constant 0 : index
    %11 = vector.load %arg7[%c12, %c0_11] : memref<36x384xf32, #tpu.memory_space<vmem>>, vector<4x384xf32>
    tpu.vector_store %arg7[%c12, %c0_11], %10 {strides = array<i32>} : memref<36x384xf32, #tpu.memory_space<vmem>>, vector<4x384xf32>,
    %c0_12 = arith.constant 0 : index
    %c0_13 = arith.constant 0 : index
    %c128 = arith.constant 128 : index
    %12 = vector.load %arg1[%c0_12, %c0_13, %c128] : memref<1x4x640xf32, #tpu.memory_space<vmem>>, vector<1x4x384xf32>
    %13 = vector.shape_cast %12 : vector<1x4x384xf32> to vector<4x384xf32>
    %c16 = arith.constant 16 : index
    %c0_14 = arith.constant 0 : index
    %14 = vector.load %arg7[%c16, %c0_14] : memref<36x384xf32, #tpu.memory_space<vmem>>, vector<4x384xf32>
    tpu.vector_store %arg7[%c16, %c0_14], %13 {strides = array<i32>} : memref<36x384xf32, #tpu.memory_space<vmem>>, vector<4x384xf32>,
    %c0_15 = arith.constant 0 : index
    %c0_16 = arith.constant 0 : index
    %c129 = arith.constant 129 : index
    %15 = vector.load %arg1[%c0_15, %c0_16, %c129] : memref<1x4x640xf32, #tpu.memory_space<vmem>>, vector<1x4x384xf32>
    %16 = vector.shape_cast %15 : vector<1x4x384xf32> to vector<4x384xf32>
    %c20 = arith.constant 20 : index
    %c0_17 = arith.constant 0 : index
    %17 = vector.load %arg7[%c20, %c0_17] : memref<36x384xf32, #tpu.memory_space<vmem>>, vector<4x384xf32>
    tpu.vector_store %arg7[%c20, %c0_17], %16 {strides = array<i32>} : memref<36x384xf32, #tpu.memory_space<vmem>>, vector<4x384xf32>,
    %c0_18 = arith.constant 0 : index
    %c0_19 = arith.constant 0 : index
    %c145 = arith.constant 145 : index
    %18 = vector.load %arg1[%c0_18, %c0_19, %c145] : memref<1x4x640xf32, #tpu.memory_space<vmem>>, vector<1x4x384xf32>
    %19 = vector.shape_cast %18 : vector<1x4x384xf32> to vector<4x384xf32>
    %c24 = arith.constant 24 : index
    %c0_20 = arith.constant 0 : index
    %20 = vector.load %arg7[%c24, %c0_20] : memref<36x384xf32, #tpu.memory_space<vmem>>, vector<4x384xf32>
    tpu.vector_store %arg7[%c24, %c0_20], %19 {strides = array<i32>} : memref<36x384xf32, #tpu.memory_space<vmem>>, vector<4x384xf32>,
    %c0_21 = arith.constant 0 : index
    %c0_22 = arith.constant 0 : index
    %c146 = arith.constant 146 : index
    %21 = vector.load %arg1[%c0_21, %c0_22, %c146] : memref<1x4x640xf32, #tpu.memory_space<vmem>>, vector<1x4x384xf32>
    %22 = vector.shape_cast %21 : vector<1x4x384xf32> to vector<4x384xf32>
    %c28 = arith.constant 28 : index
    %c0_23 = arith.constant 0 : index
    %23 = vector.load %arg7[%c28, %c0_23] : memref<36x384xf32, #tpu.memory_space<vmem>>, vector<4x384xf32>
    tpu.vector_store %arg7[%c28, %c0_23], %22 {strides = array<i32>} : memref<36x384xf32, #tpu.memory_space<vmem>>, vector<4x384xf32>,
    %c0_24 = arith.constant 0 : index
    %c0_25 = arith.constant 0 : index
    %c147 = arith.constant 147 : index
    %24 = vector.load %arg1[%c0_24, %c0_25, %c147] : memref<1x4x640xf32, #tpu.memory_space<vmem>>, vector<1x4x384xf32>
    %25 = vector.shape_cast %24 : vector<1x4x384xf32> to vector<4x384xf32>
    %c32 = arith.constant 32 : index
    %c0_26 = arith.constant 0 : index
    %26 = vector.load %arg7[%c32, %c0_26] : memref<36x384xf32, #tpu.memory_space<vmem>>, vector<4x384xf32>
    tpu.vector_store %arg7[%c32, %c0_26], %25 {strides = array<i32>} : memref<36x384xf32, #tpu.memory_space<vmem>>, vector<4x384xf32>,
    %c0_27 = arith.constant 0 : index
    %c0_28 = arith.constant 0 : index
    %27 = vector.load %arg2[%c0_27, %c0_28] : memref<32x36xf32, #tpu.memory_space<vmem>>, vector<32x36xf32>
    %c0_29 = arith.constant 0 : index
    %c0_30 = arith.constant 0 : index
    %28 = vector.load %arg7[%c0_29, %c0_30] : memref<36x384xf32, #tpu.memory_space<vmem>>, vector<36x384xf32>
    %cst = arith.constant dense<0.000000e+00> : vector<32x384xf32>
    %29 = tpu.matmul %27, %28, %cst {dimension_numbers = #tpu.dot_dimension_numbers<[1], [0], [0], [1], [0, 0, 1, 1], [], []>} : vector<32x36xf32>, vector<36x384xf32>, vector<32x384xf32> -> vector<32x384xf32>
    %c0_31 = arith.constant 0 : index
    %c0_32 = arith.constant 0 : index
    %30 = vector.load %arg3[%c0_31, %c0_32] : memref<32x1xf32, #tpu.memory_space<vmem>>, vector<32x1xf32>
    %31 = vector.broadcast %30 : vector<32x1xf32> to vector<32x384xf32>
    %32 = arith.addf %29, %31 : vector<32x384xf32>
    %cst_33 = arith.constant 0.000000e+00 : f32
    %33 = vector.broadcast %cst_33 : f32 to vector<32x384xf32>
    %34 = arith.maximumf %32, %33 : vector<32x384xf32>
    %c0_34 = arith.constant 0 : index
    %c0_35 = arith.constant 0 : index
    %35 = vector.load %arg4[%c0_34, %c0_35] : memref<32x1xf32, #tpu.memory_space<vmem>>, vector<32x1xf32>
    %36 = vector.broadcast %35 : vector<32x1xf32> to vector<32x384xf32>
    %37 = arith.mulf %34, %36 : vector<32x384xf32>
    %cst_36 = arith.constant dense<0.000000e+00> : vector<384xf32>
    %38 = vector.multi_reduction <add>, %37, %cst_36 [0] : vector<32x384xf32> to vector<384xf32>
    %39 = vector.shape_cast %38 : vector<384xf32> to vector<1x384xf32>
    %c0_37 = arith.constant 0 : index
    %c0_38 = arith.constant 0 : index
    %40 = vector.load %arg5[%c0_37, %c0_38] : memref<1x1xf32, #tpu.memory_space<vmem>>, vector<1x1xf32>
    %41 = vector.broadcast %40 : vector<1x1xf32> to vector<1x384xf32>
    %42 = arith.addf %39, %41 : vector<1x384xf32>
    %c0_39 = arith.constant 0 : index
    %c0_40 = arith.constant 0 : index
    %43 = vector.load %arg6[%c0_39, %c0_40] : memref<1x384xf32, #tpu.memory_space<vmem>>, vector<1x384xf32>
    tpu.vector_store %arg6[%c0_39, %c0_40], %42 {strides = array<i32>} : memref<1x384xf32, #tpu.memory_space<vmem>>, vector<1x384xf32>,
    return
  }
  func.func @transform_0(%arg0: i32) -> (i32, i32, i32) {
    %c0_i32 = arith.constant 0 : i32
    %c0_i32_0 = arith.constant 0 : i32
    %c0_i32_1 = arith.constant 0 : i32
    return %arg0, %c0_i32, %c0_i32_0 : i32, i32, i32
  }
  func.func @transform_1(%arg0: i32) -> (i32, i32) {
    %c0_i32 = arith.constant 0 : i32
    %c0_i32_0 = arith.constant 0 : i32
    %c0_i32_1 = arith.constant 0 : i32
    return %c0_i32, %c0_i32_0 : i32, i32
  }
  func.func @transform_2(%arg0: i32) -> (i32, i32) {
    %c0_i32 = arith.constant 0 : i32
    %c0_i32_0 = arith.constant 0 : i32
    %c0_i32_1 = arith.constant 0 : i32
    return %c0_i32, %c0_i32_0 : i32, i32
  }
  func.func @transform_3(%arg0: i32) -> (i32, i32) {
    %c0_i32 = arith.constant 0 : i32
    %c0_i32_0 = arith.constant 0 : i32
    %c0_i32_1 = arith.constant 0 : i32
    return %c0_i32, %c0_i32_0 : i32, i32
  }
  func.func @transform_4(%arg0: i32) -> (i32, i32) {
    %c0_i32 = arith.constant 0 : i32
    %c0_i32_0 = arith.constant 0 : i32
    %c0_i32_1 = arith.constant 0 : i32
    return %c0_i32, %c0_i32_0 : i32, i32
  }
  func.func @transform_5(%arg0: i32) -> (i32, i32) {
    %c0_i32 = arith.constant 0 : i32
    %c0_i32_0 = arith.constant 0 : i32
    return %c0_i32, %arg0 : i32, i32
  }
}

</mosaic_0001>

<llo_original>
// kernel: tpu_custom_call.1
$region0: #{tpu_custom_call.1}
  #allocation0 [shape = 'u32[]', space=smem, size = 0x4, offset = 0x4, fixed_abs, tag = 'smem constant byte address 0x4 - core index']
  #allocation1 [shape = 'u32[144,128]{1,0:T(1,128)}', space=vmem, size = 0x12000, scoped, tag = 'internal scratch']
  #allocation2 [shape = 'f32[36,384]{1,0:T(8,128)}', space=vmem, size = 0xf000, scoped, tag = 'scratch operand']
  #allocation3 [shape = 'f32[1,1]{1,0:T(1,128)S(1)}', space=vmem, size = 0x200, scoped, tag = 'scoped memory for tpu_custom_call.1']
  %s0 = inlined_call_operand.vmem [shape: f32[2,4,640], index: 0, kind: input, shape index: {}]
  %s1 = inlined_call_operand.vmem [shape: f32[32,36], index: 1, kind: input, shape index: {}]
  %s2 = inlined_call_operand.vmem [shape: f32[32,1], index: 2, kind: input, shape index: {}]
  %s3 = inlined_call_operand.vmem [shape: f32[32,1], index: 3, kind: input, shape index: {}]
  %s4 = inlined_call_operand.<no memory space> [shape: f32[1,1], index: 4, kind: input, shape index: {}]
  %s5 = inlined_call_operand.hbm [shape: f32[1,768], index: 5, kind: output, shape index: {}]
  %s6 = sld [smem:[#allocation0]]
  $region53: #{tpu_custom_call.1} parent=0
    _
  %s8 = ssub.s32 1, %s6
  %s9 = scalar_select 0, %s8, %s6
  %v10 = vstv %s4
  %11 = vst [vmem:[#allocation3] sm:$0x1] %v10
  $region1: #{tpu_custom_call.1} parent=0
    #allocation4 [shape = 'u8[3072]{0}', space=vmem, size = 0xc00, scoped, tag = 'output window, operand 0']
    #allocation5 [shape = 's32[2]{0}', space=sflag, size = 0x8, scoped, tag = 'scoped memory for tpu_custom_call.1']
    %12 = vsyncpa [#allocation5], 0
    %s13 = scalar_lea.sflag [#allocation5], 1
    %14 = vsyncpa %s13, 0
    loop: start=0, step=1, limit=4
    $region2: #{tpu_custom_call.1} parent=1 // loop_pre_header
      _
    $region3: #{tpu_custom_call.1} parent=1 // loop_header
      %s16 = sphi 0, %s20
      %p17 = scmp.ge.s32.totalorder %s16, 4
      %s26 = sphi 0, %s28
      %s29 = sphi 0, %s26
      %s30 = sphi 0, %s29
      %s46 = sphi 0, %s30
      %s50 = sphi 0, %s50
      %s52 = sphi 0, %s50
      %s53 = sphi 0, %s52
      %s67 = sphi 0, %s53
      %s71 = sphi 0, %s71
      %s73 = sphi 0, %s71
      %s74 = sphi 0, %s73
      %s88 = sphi 0, %s74
      %s92 = sphi 0, %s92
      %s94 = sphi 0, %s92
      %s95 = sphi 0, %s94
      %s109 = sphi 0, %s95
      %s113 = sphi 0, %s113
      %s115 = sphi 0, %s113
      %s116 = sphi 0, %s115
      %s130 = sphi 0, %s116
      %s136 = sphi 0, %s138
      %s139 = sphi 0, %s136
      %s140 = sphi 0, %s139
      %s156 = sphi 0, %s140
    $region4: #{tpu_custom_call.1} parent=1 // loop_header_branch
      %19 = sbr.rel (%p17) target = $region8
    $region5: #{tpu_custom_call.1} parent=1 // loop_body
      %s21 = ssub.s32 %s16, 1
      %s22 = ssub.s32 %s16, 2
      %s23 = sadd.s32 %s16, 1
      %s24 = ssub.s32 %s16, %s23
      %p25 = scmp.eq.s32.totalorder %s24, 0
      %s27 = sadd.s32 %s26, 1
      %s28 = scalar_select %p25, %s26, %s27
      %p31 = pneg %p25
      %p32 = scmp.eq.s32.totalorder %s16, 1
      %p33 = por %p31, %p32
      %p34 = scmp.ne.s32.totalorder %s26, %s29
      %p35 = scmp.eq.s32.totalorder %s16, 0
      %p36 = por %p34, %p35
      %p37 = scmp.ne.s32.totalorder %s26, %s29
      %p38 = scmp.eq.s32.totalorder %s21, 1
      %p39 = por %p37, %p38
      %p40 = scmp.ne.s32.totalorder %s29, %s30
      %p41 = scmp.eq.s32.totalorder %s21, 0
      %p42 = por %p40, %p41
      %p43 = scmp.ne.s32.totalorder %s29, %s30
      %p44 = scmp.eq.s32.totalorder %s22, 1
      %p45 = por %p43, %p44
      %p47 = scmp.ne.s32.totalorder %s30, %s46
      %p48 = scmp.eq.s32.totalorder %s22, 0
      %p49 = por %p47, %p48
      %s51 = sadd.s32 %s50, 1
      %p54 = scmp.eq.s32.totalorder %s16, 1
      %p55 = scmp.ne.s32.totalorder %s50, %s52
      %p56 = scmp.eq.s32.totalorder %s16, 0
      %p57 = por %p55, %p56
      %p58 = scmp.ne.s32.totalorder %s50, %s52
      %p59 = scmp.eq.s32.totalorder %s21, 1
      %p60 = por %p58, %p59
      %p61 = scmp.ne.s32.totalorder %s52, %s53
      %p62 = scmp.eq.s32.totalorder %s21, 0
      %p63 = por %p61, %p62
      %p64 = scmp.ne.s32.totalorder %s52, %s53
      %p65 = scmp.eq.s32.totalorder %s22, 1
      %p66 = por %p64, %p65
      %p68 = scmp.ne.s32.totalorder %s53, %s67
      %p69 = scmp.eq.s32.totalorder %s22, 0
      %p70 = por %p68, %p69
      %s72 = sadd.s32 %s71, 1
      %p75 = scmp.eq.s32.totalorder %s16, 1
      %p76 = scmp.ne.s32.totalorder %s71, %s73
      %p77 = scmp.eq.s32.totalorder %s16, 0
      %p78 = por %p76, %p77
      %p79 = scmp.ne.s32.totalorder %s71, %s73
      %p80 = scmp.eq.s32.totalorder %s21, 1
      %p81 = por %p79, %p80
      %p82 = scmp.ne.s32.totalorder %s73, %s74
      %p83 = scmp.eq.s32.totalorder %s21, 0
      %p84 = por %p82, %p83
      %p85 = scmp.ne.s32.totalorder %s73, %s74
      %p86 = scmp.eq.s32.totalorder %s22, 1
      %p87 = por %p85, %p86
      %p89 = scmp.ne.s32.totalorder %s74, %s88
      %p90 = scmp.eq.s32.totalorder %s22, 0
      %p91 = por %p89, %p90
      %s93 = sadd.s32 %s92, 1
      %p96 = scmp.eq.s32.totalorder %s16, 1
      %p97 = scmp.ne.s32.totalorder %s92, %s94
      %p98 = scmp.eq.s32.totalorder %s16, 0
      %p99 = por %p97, %p98
      %p100 = scmp.ne.s32.totalorder %s92, %s94
      %p101 = scmp.eq.s32.totalorder %s21, 1
      %p102 = por %p100, %p101
      %p103 = scmp.ne.s32.totalorder %s94, %s95
      %p104 = scmp.eq.s32.totalorder %s21, 0
      %p105 = por %p103, %p104
      %p106 = scmp.ne.s32.totalorder %s94, %s95
      %p107 = scmp.eq.s32.totalorder %s22, 1
      %p108 = por %p106, %p107
      %p110 = scmp.ne.s32.totalorder %s95, %s109
      %p111 = scmp.eq.s32.totalorder %s22, 0
      %p112 = por %p110, %p111
      %s114 = sadd.s32 %s113, 1
      %p117 = scmp.eq.s32.totalorder %s16, 1
      %p118 = scmp.ne.s32.totalorder %s113, %s115
      %p119 = scmp.eq.s32.totalorder %s16, 0
      %p120 = por %p118, %p119
      %p121 = scmp.ne.s32.totalorder %s113, %s115
      %p122 = scmp.eq.s32.totalorder %s21, 1
      %p123 = por %p121, %p122
      %p124 = scmp.ne.s32.totalorder %s115, %s116
      %p125 = scmp.eq.s32.totalorder %s21, 0
      %p126 = por %p124, %p125
      %p127 = scmp.ne.s32.totalorder %s115, %s116
      %p128 = scmp.eq.s32.totalorder %s22, 1
      %p129 = por %p127, %p128
      %p131 = scmp.ne.s32.totalorder %s116, %s130
      %p132 = scmp.eq.s32.totalorder %s22, 0
      %p133 = por %p131, %p132
      %s134 = ssub.s32 %s16, %s23
      %p135 = scmp.eq.s32.totalorder %s134, 0
      %s137 = sadd.s32 %s136, 1
      %s138 = scalar_select %p135, %s136, %s137
      %p141 = pneg %p135
      %p142 = scmp.eq.s32.totalorder %s16, 1
      %p143 = por %p141, %p142
      %p144 = scmp.ne.s32.totalorder %s136, %s139
      %p145 = scmp.eq.s32.totalorder %s16, 0
      %p146 = por %p144, %p145
      %p147 = scmp.ne.s32.totalorder %s136, %s139
      %p148 = scmp.eq.s32.totalorder %s21, 1
      %p149 = por %p147, %p148
      %p150 = scmp.ne.s32.totalorder %s139, %s140
      %p151 = scmp.eq.s32.totalorder %s21, 0
      %p152 = por %p150, %p151
      %p153 = scmp.ne.s32.totalorder %s139, %s140
      %p154 = scmp.eq.s32.totalorder %s22, 1
      %p155 = por %p153, %p154
      %p157 = scmp.ne.s32.totalorder %s140, %s156
      %p158 = scmp.eq.s32.totalorder %s22, 0
      %p159 = por %p157, %p158
      %p160 = scmp.le.s32.totalorder 1, %s16
      %p161 = scmp.lt.s32.totalorder %s16, 3
      %p162 = pnand %p160, %p161
      %p163 = pneg %p162
      // Predicated region
      $region9: #{tpu_custom_call.1} parent=5 // pred_check
        _
      $region10: #{tpu_custom_call.1} parent=5 // pred_check_branch
        %165 = sbr.rel (%p162) target = $region12
      $region11: #{tpu_custom_call.1} parent=5 // pred_region
        %s166 = ssub.s32 %s16, 1
        // Predicated region
        $region13: #{tpu_custom_call.1} parent=11 // pred_check
          %p167 = pneg %p63
        $region14: #{tpu_custom_call.1} parent=11 // pred_check_branch
          %169 = sbr.rel (%p167) target = $region16
        $region15: #{tpu_custom_call.1} parent=11 // pred_region
          _
        $region16: #{tpu_custom_call.1} parent=11 // pred_fallthru
          _
        // Predicated region
        $region17: #{tpu_custom_call.1} parent=11 // pred_check
          %p170 = pneg %p84
        $region18: #{tpu_custom_call.1} parent=11 // pred_check_branch
          %172 = sbr.rel (%p170) target = $region20
        $region19: #{tpu_custom_call.1} parent=11 // pred_region
          _
        $region20: #{tpu_custom_call.1} parent=11 // pred_fallthru
          _
        // Predicated region
        $region21: #{tpu_custom_call.1} parent=11 // pred_check
          %p173 = pneg %p105
        $region22: #{tpu_custom_call.1} parent=11 // pred_check_branch
          %175 = sbr.rel (%p173) target = $region24
        $region23: #{tpu_custom_call.1} parent=11 // pred_region
          _
        $region24: #{tpu_custom_call.1} parent=11 // pred_fallthru
          _
        // Predicated region
        $region25: #{tpu_custom_call.1} parent=11 // pred_check
          %p176 = pneg %p126
        $region26: #{tpu_custom_call.1} parent=11 // pred_check_branch
          %178 = sbr.rel (%p176) target = $region28
        $region27: #{tpu_custom_call.1} parent=11 // pred_region
          _
        $region28: #{tpu_custom_call.1} parent=11 // pred_fallthru
          _
      $region12: #{tpu_custom_call.1} parent=5 // pred_fallthru
        _
      %p179 = scmp.lt.s32.totalorder %s16, 2
      // Predicated region
      $region29: #{tpu_custom_call.1} parent=5 // pred_check
        %p180 = pneg %p179
      $region30: #{tpu_custom_call.1} parent=5 // pred_check_branch
        %182 = sbr.rel (%p180) target = $region32
      $region31: #{tpu_custom_call.1} parent=5 // pred_region
        // Predicated region
        $region33: #{tpu_custom_call.1} parent=31 // pred_check
          %p183 = pneg %p36
        $region34: #{tpu_custom_call.1} parent=31 // pred_check_branch
          %185 = sbr.rel (%p183) target = $region36
        $region35: #{tpu_custom_call.1} parent=31 // pred_region
          %p186 = scmp.lt.s32.totalorder %s16, 1
          %s187 = scalar_select %p186, %s16, 1
          %s188 = smul.addr %s187, 5
          %s189 = smul.addr %s188, 4
          %s190 = scalar_lea.vmem %s0, %s189
        $region36: #{tpu_custom_call.1} parent=31 // pred_fallthru
          _
      $region32: #{tpu_custom_call.1} parent=5 // pred_fallthru
        _
      %p191 = scmp.le.s32.totalorder 1, %s16
      %p192 = scmp.lt.s32.totalorder %s16, 3
      %p193 = pnand %p191, %p192
      %p194 = pneg %p193
      // Predicated region
      $region37: #{tpu_custom_call.1} parent=5 // pred_check
        _
      $region38: #{tpu_custom_call.1} parent=5 // pred_check_branch
        %196 = sbr.rel (%p193) target = $region40
      $region39: #{tpu_custom_call.1} parent=5 // pred_region
        %s197 = ssub.s32 %s16, 1
        %p198 = scmp.lt.s32.totalorder %s21, 1
        %s199 = scalar_select %p198, %s21, 1
        %s200 = smul.addr %s199, 5
        %s201 = smul.addr %s200, 4
        %s202 = scalar_lea.vmem %s0, %s201
        %p203 = pneg %p42
        %p204 = pneg %p39
        %p205 = pneg %p63
        %p206 = pneg %p60
        %p207 = pneg %p84
        %p208 = pneg %p81
        %p209 = pneg %p105
        %p210 = pneg %p102
        %p211 = pneg %p126
        %p212 = pneg %p123
        %p213 = pneg %p152
        %p214 = pneg %p149
        %s215 = sand.u32 %s139, 1
        %s216 = scalar_lea.sflag [#allocation5], %s215
        %s217 = sand.u32 %s139, 1
        %s218 = smul.addr %s217, 3
        %s219 = scalar_lea.vmem [#allocation4], %s218
        %p220 = scmp.lt.s32.totalorder %s21, 1
        %s221 = scalar_select %p220, %s21, 1
        %s222 = smul.addr %s221, 5
        %s223 = smul.addr %s222, 4
        %s224 = scalar_lea.vmem %s0, %s223
        %s225 = smul.u32 3, %s21
        %v226 = vld [vmem:[%s224] sm:$0xff]
        %v227 = vld [vmem:[%s224 + $0x8] sm:$0xff]
        %v230 = vcombine.high %v226, %v226
        %v231 = vcombine.high %v227, %v227
        %232 = vrot.lane.b32.xlu0 %v226, 19
        %v233 = vpop.permute.xlu0 %232
        %234 = vrot.lane.b32.xlu0 %v230, 19
        %v235 = vpop.permute.xlu0 %234
        %236 = vrot.lane.b32.xlu0 %v227, 19
        %v237 = vpop.permute.xlu0 %236
        %238 = vrot.lane.b32.xlu0 %v231, 19
        %v239 = vpop.permute.xlu0 %238
        %vm240 = vcmask 154624
        %v241 = vsel %vm240, %v233, %v235
        %v242 = vsel %vm240, %v235, %v237
        %v243 = vsel %vm240, %v237, %v239
        %247 = vst [vmem:[#allocation2] sm:$0xf] %v241
        %248 = vst [vmem:[#allocation2 + $0x8] sm:$0xf] %v242
        %249 = vst [vmem:[#allocation2 + $0x10] sm:$0xf] %v243
        %v250 = vld [vmem:[%s224] sm:$0xff]
        %v251 = vld [vmem:[%s224 + $0x8] sm:$0xff]
        %v254 = vcombine.low %v250, %v250
        %v255 = vcombine.low %v251, %v251
        %256 = vrot.lane.b32.xlu0 %v254, 18
        %v257 = vpop.permute.xlu0 %256
        %258 = vrot.lane.b32.xlu0 %v250, 18
        %v259 = vpop.permute.xlu0 %258
        %260 = vrot.lane.b32.xlu0 %v255, 18
        %v261 = vpop.permute.xlu0 %260
        %262 = vrot.lane.b32.xlu0 %v251, 18
        %v263 = vpop.permute.xlu0 %262
        %vm264 = vcmask 146432
        %v265 = vsel %vm264, %v257, %v259
        %v266 = vsel %vm264, %v259, %v261
        %v267 = vsel %vm264, %v261, %v263
        %271 = vst [vmem:[#allocation2] sm:$0xf0] %v265
        %272 = vst [vmem:[#allocation2 + $0x8] sm:$0xf0] %v266
        %273 = vst [vmem:[#allocation2 + $0x10] sm:$0xf0] %v267
        %v274 = vld [vmem:[%s224] sm:$0xff]
        %v275 = vld [vmem:[%s224 + $0x8] sm:$0xff]
        %v278 = vcombine.high %v274, %v274
        %v279 = vcombine.high %v275, %v275
        %280 = vrot.lane.b32.xlu0 %v274, 17
        %v281 = vpop.permute.xlu0 %280
        %282 = vrot.lane.b32.xlu0 %v278, 17
        %v283 = vpop.permute.xlu0 %282
        %284 = vrot.lane.b32.xlu0 %v275, 17
        %v285 = vpop.permute.xlu0 %284
        %286 = vrot.lane.b32.xlu0 %v279, 17
        %v287 = vpop.permute.xlu0 %286
        %vm288 = vcmask 138240
        %v289 = vsel %vm288, %v281, %v283
        %v290 = vsel %vm288, %v283, %v285
        %v291 = vsel %vm288, %v285, %v287
        %295 = vst [vmem:[#allocation2 + $0x18] sm:$0xf] %v289
        %296 = vst [vmem:[#allocation2 + $0x20] sm:$0xf] %v290
        %297 = vst [vmem:[#allocation2 + $0x28] sm:$0xf] %v291
        %v298 = vld [vmem:[%s224] sm:$0xff]
        %v299 = vld [vmem:[%s224 + $0x8] sm:$0xff]
        %v302 = vcombine.low %v298, %v298
        %v303 = vcombine.low %v299, %v299
        %304 = vrot.lane.b32.xlu0 %v302, 1
        %v305 = vpop.permute.xlu0 %304
        %306 = vrot.lane.b32.xlu0 %v298, 1
        %v307 = vpop.permute.xlu0 %306
        %308 = vrot.lane.b32.xlu0 %v303, 1
        %v309 = vpop.permute.xlu0 %308
        %310 = vrot.lane.b32.xlu0 %v299, 1
        %v311 = vpop.permute.xlu0 %310
        %vm312 = vcmask 7168
        %v313 = vsel %vm312, %v305, %v307
        %v314 = vsel %vm312, %v307, %v309
        %v315 = vsel %vm312, %v309, %v311
        %319 = vst [vmem:[#allocation2 + $0x18] sm:$0xf0] %v313
        %320 = vst [vmem:[#allocation2 + $0x20] sm:$0xf0] %v314
        %321 = vst [vmem:[#allocation2 + $0x28] sm:$0xf0] %v315
        %v322 = vld [vmem:[%s224 + $0x4] sm:$0xff]
        %v323 = vld [vmem:[%s224 + $0xc] sm:$0xf]
        %v325 = vcombine.high %v322, %v322
        %327 = vst [vmem:[#allocation2 + $0x30] sm:$0xf] %v322
        %328 = vst [vmem:[#allocation2 + $0x38] sm:$0xf] %v325
        %329 = vst [vmem:[#allocation2 + $0x40] sm:$0xf] %v323
        %v330 = vld [vmem:[%s224 + $0x4] sm:$0xff]
        %v331 = vld [vmem:[%s224 + $0xc] sm:$0xff]
        %v334 = vcombine.low %v330, %v330
        %v335 = vcombine.low %v331, %v331
        %336 = vrot.lane.b32.xlu0 %v334, 127
        %v337 = vpop.permute.xlu0 %336
        %338 = vrot.lane.b32.xlu0 %v330, 127
        %v339 = vpop.permute.xlu0 %338
        %340 = vrot.lane.b32.xlu0 %v335, 127
        %v341 = vpop.permute.xlu0 %340
        %342 = vrot.lane.b32.xlu0 %v331, 127
        %v343 = vpop.permute.xlu0 %342
        %vm344 = vcmask 1039360
        %v345 = vsel %vm344, %v337, %v339
        %v346 = vsel %vm344, %v339, %v341
        %v347 = vsel %vm344, %v341, %v343
        %351 = vst [vmem:[#allocation2 + $0x30] sm:$0xf0] %v345
        %352 = vst [vmem:[#allocation2 + $0x38] sm:$0xf0] %v346
        %353 = vst [vmem:[#allocation2 + $0x40] sm:$0xf0] %v347
        %v354 = vld [vmem:[%s224 + $0x4] sm:$0xff]
        %v355 = vld [vmem:[%s224 + $0xc] sm:$0xff]
        %v358 = vcombine.high %v354, %v354
        %v359 = vcombine.high %v355, %v355
        %360 = vrot.lane.b32.xlu0 %v354, 111
        %v361 = vpop.permute.xlu0 %360
        %362 = vrot.lane.b32.xlu0 %v358, 111
        %v363 = vpop.permute.xlu0 %362
        %364 = vrot.lane.b32.xlu0 %v355, 111
        %v365 = vpop.permute.xlu0 %364
        %366 = vrot.lane.b32.xlu0 %v359, 111
        %v367 = vpop.permute.xlu0 %366
        %vm368 = vcmask 908288
        %v369 = vsel %vm368, %v361, %v363
        %v370 = vsel %vm368, %v363, %v365
        %v371 = vsel %vm368, %v365, %v367
        %375 = vst [vmem:[#allocation2 + $0x48] sm:$0xf] %v369
        %376 = vst [vmem:[#allocation2 + $0x50] sm:$0xf] %v370
        %377 = vst [vmem:[#allocation2 + $0x58] sm:$0xf] %v371
        %v378 = vld [vmem:[%s224 + $0x4] sm:$0xff]
        %v379 = vld [vmem:[%s224 + $0xc] sm:$0xff]
        %v382 = vcombine.low %v378, %v378
        %v383 = vcombine.low %v379, %v379
        %384 = vrot.lane.b32.xlu0 %v382, 110
        %v385 = vpop.permute.xlu0 %384
        %386 = vrot.lane.b32.xlu0 %v378, 110
        %v387 = vpop.permute.xlu0 %386
        %388 = vrot.lane.b32.xlu0 %v383, 110
        %v389 = vpop.permute.xlu0 %388
        %390 = vrot.lane.b32.xlu0 %v379, 110
        %v391 = vpop.permute.xlu0 %390
        %vm392 = vcmask 900096
        %v393 = vsel %vm392, %v385, %v387
        %v394 = vsel %vm392, %v387, %v389
        %v395 = vsel %vm392, %v389, %v391
        %399 = vst [vmem:[#allocation2 + $0x48] sm:$0xf0] %v393
        %400 = vst [vmem:[#allocation2 + $0x50] sm:$0xf0] %v394
        %401 = vst [vmem:[#allocation2 + $0x58] sm:$0xf0] %v395
        %v402 = vld [vmem:[%s224 + $0x4] sm:$0xff]
        %v403 = vld [vmem:[%s224 + $0xc] sm:$0xff]
        %v406 = vcombine.high %v402, %v402
        %v407 = vcombine.high %v403, %v403
        %408 = vrot.lane.b32.xlu0 %v402, 109
        %v409 = vpop.permute.xlu0 %408
        %410 = vrot.lane.b32.xlu0 %v406, 109
        %v411 = vpop.permute.xlu0 %410
        %412 = vrot.lane.b32.xlu0 %v403, 109
        %v413 = vpop.permute.xlu0 %412
        %414 = vrot.lane.b32.xlu0 %v407, 109
        %v415 = vpop.permute.xlu0 %414
        %vm416 = vcmask 891904
        %v417 = vsel %vm416, %v409, %v411
        %v418 = vsel %vm416, %v411, %v413
        %v419 = vsel %vm416, %v413, %v415
        %423 = vst [vmem:[#allocation2 + $0x60] sm:$0xf] %v417
        %424 = vst [vmem:[#allocation2 + $0x68] sm:$0xf] %v418
        %425 = vst [vmem:[#allocation2 + $0x70] sm:$0xf] %v419
        %v426 = vld [vmem:[%s1] sm:$0xff]
        %v427 = vld [vmem:[%s1 + $0x8] sm:$0xff]
        %v428 = vld [vmem:[%s1 + $0x10] sm:$0xff]
        %v429 = vld [vmem:[%s1 + $0x18] sm:$0xff]
        %v430 = vld [vmem:[#allocation2] sm:$0xff]
        %v431 = vld [vmem:[#allocation2 + $0x8] sm:$0xff]
        %v432 = vld [vmem:[#allocation2 + $0x10] sm:$0xff]
        %v433 = vld [vmem:[#allocation2 + $0x18] sm:$0xff]
        %v434 = vld [vmem:[#allocation2 + $0x20] sm:$0xff]
        %v435 = vld [vmem:[#allocation2 + $0x28] sm:$0xff]
        %v436 = vld [vmem:[#allocation2 + $0x30] sm:$0xff]
        %v437 = vld [vmem:[#allocation2 + $0x38] sm:$0xff]
        %v438 = vld [vmem:[#allocation2 + $0x40] sm:$0xff]
        %v439 = vld [vmem:[#allocation2 + $0x48] sm:$0xff]
        %v440 = vld [vmem:[#allocation2 + $0x50] sm:$0xff]
        %v441 = vld [vmem:[#allocation2 + $0x58] sm:$0xff]
        %v442 = vld [vmem:[#allocation2 + $0x60] sm:$0xf]
        %v443 = vld [vmem:[#allocation2 + $0x68] sm:$0xf]
        %v444 = vld [vmem:[#allocation2 + $0x70] sm:$0xf]
        %v445 = vld [vmem:[%s2] sm:$0xff]
        %v446 = vld [vmem:[%s2 + $0x8] sm:$0xff]
        %v447 = vld [vmem:[%s2 + $0x10] sm:$0xff]
        %v448 = vld [vmem:[%s2 + $0x18] sm:$0xff]
        %450 = vset.pattern.permute.xlu0 0
        %451 = vperm.xlu0 %450, %v445
        %v452 = vpop.permute.xlu0 %451
        %455 = vset.pattern.permute.xlu0 0
        %456 = vperm.xlu0 %455, %v446
        %v457 = vpop.permute.xlu0 %456
        %460 = vset.pattern.permute.xlu0 0
        %461 = vperm.xlu0 %460, %v447
        %v462 = vpop.permute.xlu0 %461
        %465 = vset.pattern.permute.xlu0 0
        %466 = vperm.xlu0 %465, %v448
        %v467 = vpop.permute.xlu0 %466
        %vm469 = vcmask 293888
        %v471 = vsel %vm469, %v426, 0
        %v474 = vsel %vm469, %v427, 0
        %v477 = vsel %vm469, %v428, 0
        %v480 = vsel %vm469, %v429, 0
        %vm482 = vcmask 1043456
        %v484 = vsel %vm482, %v442, 0
        %v487 = vsel %vm482, %v443, 0
        %v490 = vsel %vm482, %v444, 0
        %492 = vmatprep.subr.mxu0 %v431
        %493 = vmatpush1.msra.mxu0 %v430
        %494 = vmatprep.subr.mxu0 %v434
        %495 = vmatpush1.msra.mxu0 %v433
        %496 = vmatprep.subr.mxu0 %v437
        %497 = vmatpush1.msra.mxu0 %v436
        %498 = vmatprep.subr.mxu0 %v440
        %499 = vmatpush1.msra.mxu0 %v439
        %500 = vmatprep.subr.mxu0 %v487
        %501 = vmatpush1.msra.mxu0 %v484
        %502 = vmatprep.subr.mxu0 0.0
        %503 = vmatpush1.msra.mxu0 0.0
        %504 = vmatprep.subr.mxu0 0.0
        %505 = vmatpush1.msra.mxu0 0.0
        %506 = vmatprep.subr.mxu0 0.0
        %507 = vmatpush1.msra.mxu0 0.0
        %508 = vmatprep.subr.mxu0 0.0
        %509 = vmatpush1.msra.mxu0 0.0
        %510 = vmatprep.subr.mxu0 0.0
        %511 = vmatpush1.msra.mxu0 0.0
        %512 = vmatprep.subr.mxu0 0.0
        %513 = vmatpush1.msra.mxu0 0.0
        %514 = vmatprep.subr.mxu0 0.0
        %515 = vmatpush1.msra.mxu0 0.0
        %516 = vmatprep.subr.mxu0 0.0
        %517 = vmatpush1.msra.mxu0 0.0
        %518 = vmatprep.subr.mxu0 0.0
        %519 = vmatpush1.msra.mxu0 0.0
        %520 = vmatprep.subr.mxu0 0.0
        %521 = vmatpush1.msra.mxu0 0.0
        %522 = vmatprep.subr.mxu0 0.0
        %523 = vmatpush1.msra.mxu0 0.0
        %524 = vmatprep.subr.mxu0 0.0
        %525 = vmatpush1.msra.mxu0 0.0
        %526 = vmatprep.subr.mxu0 0.0
        %527 = vmatpush1.msra.mxu0 0.0
        %528 = vmatprep.subr.mxu0 0.0
        %529 = vmatpush1.msra.mxu0 0.0
        %530 = vmatprep.subr.mxu0 0.0
        %531 = vmatpush1.msra.mxu0 0.0
        %532 = vmatprep.subr.mxu0 0.0
        %533 = vmatpush1.msra.mxu0 0.0
        %534 = vmatprep.subr.mxu0 0.0
        %535 = vmatpush1.msra.mxu0 0.0
        %536 = vmatprep.subr.mxu0 0.0
        %537 = vmatpush1.msra.mxu0 0.0
        %538 = vmatprep.subr.mxu0 0.0
        %539 = vmatpush1.msra.mxu0 0.0
        %540 = vmatprep.subr.mxu0 0.0
        %541 = vmatpush1.msra.mxu0 0.0
        %542 = vmatprep.subr.mxu0 0.0
        %543 = vmatpush1.msra.mxu0 0.0
        %544 = vmatprep.subr.mxu0 0.0
        %545 = vmatpush1.msra.mxu0 0.0
        %546 = vmatprep.subr.mxu0 0.0
        %547 = vmatpush1.msra.mxu0 0.0
        %548 = vmatprep.subr.mxu0 0.0
        %549 = vmatpush1.msra.mxu0 0.0
        %550 = vmatprep.subr.mxu0 0.0
        %551 = vmatpush1.msra.mxu0 0.0
        %552 = vmatprep.subr.mxu0 0.0
        %553 = vmatpush1.msra.mxu0 0.0
        %554 = vmatprep.subr.mxu0 0.0
        %555 = vmatpush1.msra.mxu0 0.0
        %556 = vmatprep.mubr.f32.mxu0 0.0
        %557 = vmatmul.mubr.f32.gmra.mrb[0].mxu0 %v471
        %v558 = vpop.f32.mrb[0].mxu0
        %v559 = vadd.f32 %v452, %v558
        %v560 = vpop.f32.mrb[0].mxu0
        %v561 = vadd.f32 %v452, %v560
        %562 = vmatprep.mubr.f32.mxu0 0.0
        %563 = vmatmul.mubr.f32.gmra.mrb[0].mxu0 %v474
        %v564 = vpop.f32.mrb[0].mxu0
        %v565 = vadd.f32 %v457, %v564
        %v566 = vpop.f32.mrb[0].mxu0
        %v567 = vadd.f32 %v457, %v566
        %568 = vmatprep.mubr.f32.mxu0 0.0
        %569 = vmatmul.mubr.f32.gmra.mrb[0].mxu0 %v477
        %v570 = vpop.f32.mrb[0].mxu0
        %v571 = vadd.f32 %v462, %v570
        %v572 = vpop.f32.mrb[0].mxu0
        %v573 = vadd.f32 %v462, %v572
        %574 = vmatprep.mubr.f32.mxu0 0.0
        %575 = vmatmul.mubr.f32.gmra.mrb[0].mxu0 %v480
        %v576 = vpop.f32.mrb[0].mxu0
        %v577 = vadd.f32 %v467, %v576
        %v578 = vpop.f32.mrb[0].mxu0
        %v579 = vadd.f32 %v467, %v578
        %580 = vdwg.mxu0
        %581 = vmatprep.subr.mxu0 0.0
        %582 = vmatpush1.msra.mxu0 %v432
        %583 = vmatprep.subr.mxu0 0.0
        %584 = vmatpush1.msra.mxu0 %v435
        %585 = vmatprep.subr.mxu0 0.0
        %586 = vmatpush1.msra.mxu0 %v438
        %587 = vmatprep.subr.mxu0 0.0
        %588 = vmatpush1.msra.mxu0 %v441
        %589 = vmatprep.subr.mxu0 0.0
        %590 = vmatpush1.msra.mxu0 %v490
        %591 = vmatprep.subr.mxu0 0.0
        %592 = vmatpush1.msra.mxu0 0.0
        %593 = vmatprep.subr.mxu0 0.0
        %594 = vmatpush1.msra.mxu0 0.0
        %595 = vmatprep.subr.mxu0 0.0
        %596 = vmatpush1.msra.mxu0 0.0
        %597 = vmatprep.subr.mxu0 0.0
        %598 = vmatpush1.msra.mxu0 0.0
        %599 = vmatprep.subr.mxu0 0.0
        %600 = vmatpush1.msra.mxu0 0.0
        %601 = vmatprep.subr.mxu0 0.0
        %602 = vmatpush1.msra.mxu0 0.0
        %603 = vmatprep.subr.mxu0 0.0
        %604 = vmatpush1.msra.mxu0 0.0
        %605 = vmatprep.subr.mxu0 0.0
        %606 = vmatpush1.msra.mxu0 0.0
        %607 = vmatprep.subr.mxu0 0.0
        %608 = vmatpush1.msra.mxu0 0.0
        %609 = vmatprep.subr.mxu0 0.0
        %610 = vmatpush1.msra.mxu0 0.0
        %611 = vmatprep.subr.mxu0 0.0
        %612 = vmatpush1.msra.mxu0 0.0
        %613 = vmatprep.subr.mxu0 0.0
        %614 = vmatpush1.msra.mxu0 0.0
        %615 = vmatprep.subr.mxu0 0.0
        %616 = vmatpush1.msra.mxu0 0.0
        %617 = vmatprep.subr.mxu0 0.0
        %618 = vmatpush1.msra.mxu0 0.0
        %619 = vmatprep.subr.mxu0 0.0
        %620 = vmatpush1.msra.mxu0 0.0
        %621 = vmatprep.subr.mxu0 0.0
        %622 = vmatpush1.msra.mxu0 0.0
        %623 = vmatprep.subr.mxu0 0.0
        %624 = vmatpush1.msra.mxu0 0.0
        %625 = vmatprep.subr.mxu0 0.0
        %626 = vmatpush1.msra.mxu0 0.0
        %627 = vmatprep.subr.mxu0 0.0
        %628 = vmatpush1.msra.mxu0 0.0
        %629 = vmatprep.subr.mxu0 0.0
        %630 = vmatpush1.msra.mxu0 0.0
        %631 = vmatprep.subr.mxu0 0.0
        %632 = vmatpush1.msra.mxu0 0.0
        %633 = vmatprep.subr.mxu0 0.0
        %634 = vmatpush1.msra.mxu0 0.0
        %635 = vmatprep.subr.mxu0 0.0
        %636 = vmatpush1.msra.mxu0 0.0
        %637 = vmatprep.subr.mxu0 0.0
        %638 = vmatpush1.msra.mxu0 0.0
        %639 = vmatprep.subr.mxu0 0.0
        %640 = vmatpush1.msra.mxu0 0.0
        %641 = vmatprep.subr.mxu0 0.0
        %642 = vmatpush1.msra.mxu0 0.0
        %643 = vmatprep.subr.mxu0 0.0
        %644 = vmatpush1.msra.mxu0 0.0
        %645 = vmatprep.mubr.f32.mxu0 0.0
        %646 = vmatmul.mubr.f32.gmra.mrb[0].mxu0 %v471
        %v647 = vpop.f32.mrb[0].mxu0
        %v648 = vadd.f32 %v452, %v647
        %v649 = vpop.f32.mrb[0].mxu0
        %650 = vmatprep.mubr.f32.mxu0 0.0
        %651 = vmatmul.mubr.f32.gmra.mrb[0].mxu0 %v474
        %v652 = vpop.f32.mrb[0].mxu0
        %v653 = vadd.f32 %v457, %v652
        %v654 = vpop.f32.mrb[0].mxu0
        %655 = vmatprep.mubr.f32.mxu0 0.0
        %656 = vmatmul.mubr.f32.gmra.mrb[0].mxu0 %v477
        %v657 = vpop.f32.mrb[0].mxu0
        %v658 = vadd.f32 %v462, %v657
        %v659 = vpop.f32.mrb[0].mxu0
        %660 = vmatprep.mubr.f32.mxu0 0.0
        %661 = vmatmul.mubr.f32.gmra.mrb[0].mxu0 %v480
        %v662 = vpop.f32.mrb[0].mxu0
        %v663 = vadd.f32 %v467, %v662
        %v664 = vpop.f32.mrb[0].mxu0
        %665 = vdwg.mxu0
        %v666 = vmax.f32 %v559, 0.0
        %v667 = vmax.f32 %v561, 0.0
        %v668 = vmax.f32 %v648, 0.0
        %v669 = vmax.f32 %v565, 0.0
        %v670 = vmax.f32 %v567, 0.0
        %v671 = vmax.f32 %v653, 0.0
        %v672 = vmax.f32 %v571, 0.0
        %v673 = vmax.f32 %v573, 0.0
        %v674 = vmax.f32 %v658, 0.0
        %v675 = vmax.f32 %v577, 0.0
        %v676 = vmax.f32 %v579, 0.0
        %v677 = vmax.f32 %v663, 0.0
        %v678 = vld [vmem:[%s3] sm:$0xff]
        %v679 = vld [vmem:[%s3 + $0x8] sm:$0xff]
        %v680 = vld [vmem:[%s3 + $0x10] sm:$0xff]
        %v681 = vld [vmem:[%s3 + $0x18] sm:$0xff]
        %683 = vset.pattern.permute.xlu0 0
        %684 = vperm.xlu0 %683, %v678
        %v685 = vpop.permute.xlu0 %684
        %688 = vset.pattern.permute.xlu0 0
        %689 = vperm.xlu0 %688, %v679
        %v690 = vpop.permute.xlu0 %689
        %693 = vset.pattern.permute.xlu0 0
        %694 = vperm.xlu0 %693, %v680
        %v695 = vpop.permute.xlu0 %694
        %698 = vset.pattern.permute.xlu0 0
        %699 = vperm.xlu0 %698, %v681
        %v700 = vpop.permute.xlu0 %699
        %v702 = vmul.f32 %v666, %v685
        %v703 = vmul.f32 %v667, %v685
        %v704 = vmul.f32 %v668, %v685
        %v705 = vmul.f32 %v669, %v690
        %v706 = vmul.f32 %v670, %v690
        %v707 = vmul.f32 %v671, %v690
        %v708 = vmul.f32 %v672, %v695
        %v709 = vmul.f32 %v673, %v695
        %v710 = vmul.f32 %v674, %v695
        %v711 = vmul.f32 %v675, %v700
        %v712 = vmul.f32 %v676, %v700
        %v713 = vmul.f32 %v677, %v700
        %v714 = vadd.f32 %v702, %v705
        %v715 = vadd.f32 %v714, %v708
        %v716 = vadd.f32 %v715, %v711
        %v717 = vrot.slane %v716, 4
        %v718 = vadd.f32 %v716, %v717
        %v719 = vrot.slane %v718, 2
        %v720 = vadd.f32 %v718, %v719
        %v721 = vrot.slane %v720, 1
        %v722 = vadd.f32 %v720, %v721
        %v723 = vadd.f32 %v703, %v706
        %v724 = vadd.f32 %v723, %v709
        %v725 = vadd.f32 %v724, %v712
        %v726 = vrot.slane %v725, 4
        %v727 = vadd.f32 %v725, %v726
        %v728 = vrot.slane %v727, 2
        %v729 = vadd.f32 %v727, %v728
        %v730 = vrot.slane %v729, 1
        %v731 = vadd.f32 %v729, %v730
        %v732 = vadd.f32 %v704, %v707
        %v733 = vadd.f32 %v732, %v710
        %v734 = vadd.f32 %v733, %v713
        %v735 = vrot.slane %v734, 4
        %v736 = vadd.f32 %v734, %v735
        %v737 = vrot.slane %v736, 2
        %v738 = vadd.f32 %v736, %v737
        %v739 = vrot.slane %v738, 1
        %v740 = vadd.f32 %v738, %v739
        %v741 = vld [vmem:[#allocation3] sm:$0x1]
        %743 = vset.pattern.permute.xlu0 0
        %744 = vperm.xlu0 %743, %v741
        %v745 = vpop.permute.xlu0 %744
        %v747 = vlaneseq
        %v748 = vshrl.u32 %v747, 7
        %v749 = vsub.s32 0, %v748
        %v750 = vrot.slane %v745, %v749
        %v751 = vadd.f32 %v722, %v750
        %v752 = vadd.f32 %v731, %v750
        %v753 = vadd.f32 %v740, %v750
        %v757 = vcombine.low %v751, %v752
        %v759 = vunpack.c.l.s4 1966171168
        %v760 = vunpack.c.0.s8 %v759
        %v761 = vlaneseq
        %v762 = vshrl.u32 %v761, 7
        %v763 = vsub.s32 %v760, %v762
        %v764 = vrot.slane %v757, %v763
        %v766 = vunpack.c.l.s4 1966171168
        %v767 = vunpack.c.0.s8 %v766
        %v768 = vlaneseq
        %v769 = vshrl.u32 %v768, 7
        %v770 = vsub.s32 %v767, %v769
        %v771 = vrot.slane %v753, %v770
        %v772 = vcombine.low %v764, %v771
        %v774 = vunpack.c.l.s4 1966171168
        %v775 = vunpack.c.0.s8 %v774
        %v776 = vlaneseq
        %v777 = vshrl.u32 %v776, 7
        %v778 = vsub.s32 %v775, %v777
        %v779 = vrot.slane %v772, %v778
        %v781 = vlaneseq
        %vm782 = vcmp.ge.s32.totalorder %v781, 0
        %vm783 = vcmp.lt.s32.totalorder %v781, 384
        %vm784 = vmand %vm782, %vm783
        %785 = vst.msk [vmem:[%s219] sm:$0x7] %vm784, %v779
        %s786 = sand.u32 %s139, 1
        %s787 = scalar_lea.sflag [#allocation5], %s786
        %s788 = sand.u32 %s139, 1
        %s789 = smul.addr %s788, 3
        %s790 = scalar_lea.vmem [#allocation4], %s789
        // Predicated region
        $region41: #{tpu_custom_call.1} parent=39 // pred_check
          %p791 = pneg %p149
        $region42: #{tpu_custom_call.1} parent=39 // pred_check_branch
          %793 = sbr.rel (%p791) target = $region44
        $region43: #{tpu_custom_call.1} parent=39 // pred_region
          %s794 = smul.u32 3, %s21
          %s796 = ssub.s32 48, 48
          %797 = vsyncadd %s787, %s796
          %s798 = smul.addr %s794, 16
          %s799 = scalar_lea.hbm %s5, %s798
          %s801 = sshll.u32 %s790, 4
          %s802 = int_to_ptr.vmem [resolvable:$true] %s801
          %804 = dma.vmem_to_hbm [thread:$0]  %s802, 48, %s799, %s787
        $region44: #{tpu_custom_call.1} parent=39 // pred_fallthru
          _
      $region40: #{tpu_custom_call.1} parent=5 // pred_fallthru
        _
      %p805 = scmp.le.s32.totalorder 2, %s16
      // Predicated region
      $region45: #{tpu_custom_call.1} parent=5 // pred_check
        %p806 = pneg %p805
      $region46: #{tpu_custom_call.1} parent=5 // pred_check_branch
        %808 = sbr.rel (%p806) target = $region48
      $region47: #{tpu_custom_call.1} parent=5 // pred_region
        %s809 = ssub.s32 %s16, 2
        // Predicated region
        $region49: #{tpu_custom_call.1} parent=47 // pred_check
          %p810 = pneg %p155
        $region50: #{tpu_custom_call.1} parent=47 // pred_check_branch
          %812 = sbr.rel (%p810) target = $region52
        $region51: #{tpu_custom_call.1} parent=47 // pred_region
          %s813 = sand.u32 %s140, 1
          %s814 = scalar_lea.sflag [#allocation5], %s813
          %s815 = sand.u32 %s140, 1
          %s816 = smul.addr %s815, 3
          %s817 = scalar_lea.vmem [#allocation4], %s816
          %818 = dma.done %s814, 48
        $region52: #{tpu_custom_call.1} parent=47 // pred_fallthru
          _
      $region48: #{tpu_custom_call.1} parent=5 // pred_fallthru
        _
    $region6: #{tpu_custom_call.1} parent=1 // loop_footer
      %s20 = sadd.s32 1, %s16
    $region7: #{tpu_custom_call.1} parent=1 // loop_footer_branch
      %15 = sbr.rel target = $region3
    $region8: #{tpu_custom_call.1} parent=1 // loop_exit
      _
    %819 = vsyncpa [#allocation5], 1
    %s820 = scalar_lea.sflag [#allocation5], 1
    %821 = vsyncpa %s820, 1

</llo_original>
